<compile_context>
chip_gen: v6e
topology: v6e:2x2x1
jax: 0.10.0
libtpu: 0.0.40
codegen_flags: <defaults>
</compile_context>

<pallas_src>
import jax
import jax.numpy as jnp
from jax.experimental import pallas as pl
from jax.experimental.pallas import tpu as pltpu


def _is_object_kernel(x_ref, w1_ref, b1_ref, w2_ref, b2_ref, o_ref):
    # x_ref : (tm, 128)  packed activations (4 batch rows per 128 lanes)
    # w1_ref: (128, 128) block-diagonal first linear
    # b1_ref: (1, 128)   tiled bias
    # w2_ref: (128, 4)   block second linear
    # b2_ref: (1, 4)     tiled bias
    # o_ref : (tm, 4)    one score per packed batch row
    h = jnp.dot(x_ref[...], w1_ref[...], preferred_element_type=jnp.float32)
    h = jnp.maximum(h + b1_ref[...], 0.0)                       # bias + ReLU (VPU)
    y = jnp.dot(h, w2_ref[...], preferred_element_type=jnp.float32)
    o_ref[...] = jax.nn.sigmoid(y + b2_ref[...]).astype(o_ref.dtype)


def is_object_predicate(x, w1, b1, w2, b2, *, tm=1024):
    """Fused score-net forward.

    x : (N, D) float32.  w1: (D, H), b1: (1, H), w2: (H, 1), b2: (1, 1),
    all stored (in, out) (i.e. PyTorch weights transposed).
    Returns (N, 1) float32 scores in (0, 1).
    """
    N, D = x.shape
    H = w1.shape[1]
    assert 128 % D == 0 and 128 % H == 0, "row packing assumes the 32-wide MLP"
    P = 128 // D                       # batch rows packed per 128-lane row (4)

    # ---- wrapper-side layout plumbing (reshape is contiguous -> free) ----------
    rows = pl.cdiv(N, P)               # packed rows
    n_pad = rows * P
    if n_pad != N:
        x = jnp.pad(x, ((0, n_pad - N), (0, 0)))
    xp = x.reshape(rows, P * D)                                   # (N/4, 128)

    eye_p = jnp.eye(P, dtype=x.dtype)
    w1_blk = jnp.einsum("pq,dh->pdqh", eye_p, w1).reshape(P * D, P * H)  # (128,128)
    b1_blk = jnp.tile(b1, (1, P))                                        # (1,128)
    w2_blk = jnp.einsum("pq,ho->phqo", eye_p, w2).reshape(P * H, P)      # (128,4)
    b2_blk = jnp.tile(b2, (1, P))                                        # (1,4)

    # ---- tile selection: multiple of 8 sublanes; grid iterates over the batch --
    if rows <= tm:
        tm_eff = rows                  # single tile == full dim (always legal)
    else:
        tm_eff = max(8, (tm // 8) * 8)
    grid = (pl.cdiv(rows, tm_eff),)

    out = pl.pallas_call(
        _is_object_kernel,
        out_shape=jax.ShapeDtypeStruct((rows, P), jnp.float32),
        grid_spec=pltpu.PrefetchScalarGridSpec(
            num_scalar_prefetch=0,
            grid=grid,
            in_specs=[
                # Streamed activation tile.  If xprof ever shows exposed DMA at
                # step boundaries, deepen the pipeline with:
                #   pl.BlockSpec((tm_eff, P * D), lambda i: (i, 0),
                #                pipeline_mode=pl.Buffered(3))
                pl.BlockSpec((tm_eff, P * D), lambda i: (i, 0)),
                pl.BlockSpec((P * D, P * H), lambda i: (0, 0)),   # W1 block-diag (resident)
                pl.BlockSpec((1, P * H), lambda i: (0, 0)),       # b1
                pl.BlockSpec((P * H, P), lambda i: (0, 0)),       # W2 block
                pl.BlockSpec((1, P), lambda i: (0, 0)),           # b2
            ],
            out_specs=pl.BlockSpec((tm_eff, P), lambda i: (i, 0)),
        ),
        compiler_params=pltpu.CompilerParams(
            dimension_semantics=("parallel",),   # batch tiles shard across TCs (v7x)
        ),
    )(xp, w1_blk, b1_blk, w2_blk, b2_blk)

    # Undo the packing: (rows, P) row-major is exactly the original row order.
    return out.reshape(n_pad, 1)[:N]


def init_params(key, input_dim=32, hidden=32):
    """Deterministic init mimicking nn.Linear's uniform(-1/sqrt(in), 1/sqrt(in))."""
    k1, k2, k3, k4 = jax.random.split(key, 4)
    lim1 = 1.0 / jnp.sqrt(input_dim)
    lim2 = 1.0 / jnp.sqrt(hidden)
    # Stored as (in, out); equivalent to PyTorch's W (out, in) transposed.
    w1 = jax.random.uniform(k1, (input_dim, hidden), jnp.float32, -lim1, lim1)
    b1 = jax.random.uniform(k2, (1, hidden), jnp.float32, -lim1, lim1)
    w2 = jax.random.uniform(k3, (hidden, 1), jnp.float32, -lim2, lim2)
    b2 = jax.random.uniform(k4, (1, 1), jnp.float32, -lim2, lim2)
    return w1, b1, w2, b2


if __name__ == "__main__":
    key = jax.random.PRNGKey(0)
    k_x, k_p = jax.random.split(key)

    batch, input_dim, hidden = 8, 32, 32
    x = jax.random.normal(k_x, (batch, input_dim), jnp.float32)
    w1, b1, w2, b2 = init_params(k_p, input_dim, hidden)

    out = jax.block_until_ready(is_object_predicate(x, w1, b1, w2, b2))
    ref = jax.nn.sigmoid(jnp.maximum(x @ w1 + b1, 0.0) @ w2 + b2)
    assert out.shape == (batch, 1)
    assert jnp.allclose(out, ref, atol=1e-5, rtol=1e-5)

    # Secondary check: non-aligned batch exercises padding, a multi-step grid
    # (two tiles with tm=1024 packed rows) and tail-block clipping.
    x2 = jax.random.normal(jax.random.PRNGKey(1), (4999, input_dim), jnp.float32)
    out2 = jax.block_until_ready(is_object_predicate(x2, w1, b1, w2, b2, tm=1024))
    ref2 = jax.nn.sigmoid(jnp.maximum(x2 @ w1 + b1, 0.0) @ w2 + b2)
    assert out2.shape == (4999, 1)
    assert jnp.allclose(out2, ref2, atol=1e-5, rtol=1e-5)

    print("KERNEL_OK")
</pallas_src>

<mosaic_0001>
module attributes {stable_mosaic.version = 11 : i64} {
  func.func @_is_object_kernel(%arg0: i32, %arg1: memref<2x128xf32, #tpu.memory_space<vmem>>, %arg2: memref<128x128xf32, #tpu.memory_space<vmem>>, %arg3: memref<1x128xf32, #tpu.memory_space<vmem>>, %arg4: memref<128x4xf32, #tpu.memory_space<vmem>>, %arg5: memref<1x4xf32, #tpu.memory_space<vmem>>, %arg6: memref<2x4xf32, #tpu.memory_space<vmem>>) attributes {dimension_semantics = [#tpu.dimension_semantics<parallel>], iteration_bounds = array<i64: 1>, scalar_prefetch = 0 : i64, scratch_operands = 0 : i64, tpu.core_type = #tpu.core_type<tc>, window_params = [{transform_indices = @transform_0, window_bounds = array<i64: 2, 128>}, {pipeline_mode = #tpu.pipeline_mode<synchronous>, transform_indices = @transform_1, window_bounds = array<i64: 128, 128>}, {pipeline_mode = #tpu.pipeline_mode<synchronous>, transform_indices = @transform_2, window_bounds = array<i64: 1, 128>}, {pipeline_mode = #tpu.pipeline_mode<synchronous>, transform_indices = @transform_3, window_bounds = array<i64: 128, 4>}, {pipeline_mode = #tpu.pipeline_mode<synchronous>, transform_indices = @transform_4, window_bounds = array<i64: 1, 4>}, {transform_indices = @transform_5, window_bounds = array<i64: 2, 4>}]} {
    %c0 = arith.constant 0 : index
    %c0_0 = arith.constant 0 : index
    %0 = vector.load %arg1[%c0, %c0_0] : memref<2x128xf32, #tpu.memory_space<vmem>>, vector<2x128xf32>
    %c0_1 = arith.constant 0 : index
    %c0_2 = arith.constant 0 : index
    %1 = vector.load %arg2[%c0_1, %c0_2] : memref<128x128xf32, #tpu.memory_space<vmem>>, vector<128x128xf32>
    %cst = arith.constant dense<0.000000e+00> : vector<2x128xf32>
    %2 = tpu.matmul %0, %1, %cst {dimension_numbers = #tpu.dot_dimension_numbers<[1], [0], [0], [1], [0, 0, 1, 1], [], []>} : vector<2x128xf32>, vector<128x128xf32>, vector<2x128xf32> -> vector<2x128xf32>
    %c0_3 = arith.constant 0 : index
    %c0_4 = arith.constant 0 : index
    %3 = vector.load %arg3[%c0_3, %c0_4] : memref<1x128xf32, #tpu.memory_space<vmem>>, vector<1x128xf32>
    %4 = vector.broadcast %3 : vector<1x128xf32> to vector<2x128xf32>
    %5 = arith.addf %2, %4 : vector<2x128xf32>
    %cst_5 = arith.constant 0.000000e+00 : f32
    %6 = vector.broadcast %cst_5 : f32 to vector<2x128xf32>
    %7 = arith.maximumf %5, %6 : vector<2x128xf32>
    %c0_6 = arith.constant 0 : index
    %c0_7 = arith.constant 0 : index
    %8 = vector.load %arg4[%c0_6, %c0_7] : memref<128x4xf32, #tpu.memory_space<vmem>>, vector<128x4xf32>
    %cst_8 = arith.constant dense<0.000000e+00> : vector<2x4xf32>
    %9 = tpu.matmul %7, %8, %cst_8 {dimension_numbers = #tpu.dot_dimension_numbers<[1], [0], [0], [1], [0, 0, 1, 1], [], []>} : vector<2x128xf32>, vector<128x4xf32>, vector<2x4xf32> -> vector<2x4xf32>
    %c0_9 = arith.constant 0 : index
    %c0_10 = arith.constant 0 : index
    %10 = vector.load %arg5[%c0_9, %c0_10] : memref<1x4xf32, #tpu.memory_space<vmem>>, vector<1x4xf32>
    %11 = vector.broadcast %10 : vector<1x4xf32> to vector<2x4xf32>
    %12 = arith.addf %9, %11 : vector<2x4xf32>
    %13 = arith.negf %12 : vector<2x4xf32>
    %14 = math.exp %13 : vector<2x4xf32>
    %cst_11 = arith.constant 1.000000e+00 : f32
    %15 = vector.broadcast %cst_11 : f32 to vector<2x4xf32>
    %16 = arith.addf %15, %14 : vector<2x4xf32>
    %17 = arith.divf %15, %16 : vector<2x4xf32>
    %c0_12 = arith.constant 0 : index
    %c0_13 = arith.constant 0 : index
    %18 = vector.load %arg6[%c0_12, %c0_13] : memref<2x4xf32, #tpu.memory_space<vmem>>, vector<2x4xf32>
    tpu.vector_store %arg6[%c0_12, %c0_13], %17 {strides = array<i32>} : memref<2x4xf32, #tpu.memory_space<vmem>>, vector<2x4xf32>,
    return
  }
  func.func @transform_0(%arg0: i32) -> (i32, i32) {
    %c0_i32 = arith.constant 0 : i32
    %c0_i32_0 = arith.constant 0 : i32
    return %arg0, %c0_i32 : i32, i32
  }
  func.func @transform_1(%arg0: i32) -> (i32, i32) {
    %c0_i32 = arith.constant 0 : i32
    %c0_i32_0 = arith.constant 0 : i32
    %c0_i32_1 = arith.constant 0 : i32
    return %c0_i32, %c0_i32_0 : i32, i32
  }
  func.func @transform_2(%arg0: i32) -> (i32, i32) {
    %c0_i32 = arith.constant 0 : i32
    %c0_i32_0 = arith.constant 0 : i32
    %c0_i32_1 = arith.constant 0 : i32
    return %c0_i32, %c0_i32_0 : i32, i32
  }
  func.func @transform_3(%arg0: i32) -> (i32, i32) {
    %c0_i32 = arith.constant 0 : i32
    %c0_i32_0 = arith.constant 0 : i32
    %c0_i32_1 = arith.constant 0 : i32
    return %c0_i32, %c0_i32_0 : i32, i32
  }
  func.func @transform_4(%arg0: i32) -> (i32, i32) {
    %c0_i32 = arith.constant 0 : i32
    %c0_i32_0 = arith.constant 0 : i32
    %c0_i32_1 = arith.constant 0 : i32
    return %c0_i32, %c0_i32_0 : i32, i32
  }
  func.func @transform_5(%arg0: i32) -> (i32, i32) {
    %c0_i32 = arith.constant 0 : i32
    %c0_i32_0 = arith.constant 0 : i32
    return %arg0, %c0_i32 : i32, i32
  }
}

</mosaic_0001>

<llo_original>
// kernel: tpu_custom_call.1
$region0: #{tpu_custom_call.1}
  #allocation0 [shape = 'u32[]', space=smem, size = 0x4, offset = 0x4, fixed_abs, tag = 'smem constant byte address 0x4 - core index']
  #allocation1 [shape = 'u32[144,128]{1,0:T(1,128)}', space=vmem, size = 0x12000, scoped, tag = 'internal scratch']
  %s0 = inlined_call_operand.vmem [shape: f32[2,128], index: 0, kind: input, shape index: {}]
  %s1 = inlined_call_operand.vmem [shape: f32[128,128], index: 1, kind: input, shape index: {}]
  %s2 = inlined_call_operand.vmem [shape: f32[1,128], index: 2, kind: input, shape index: {}]
  %s3 = inlined_call_operand.vmem [shape: f32[128,4], index: 3, kind: input, shape index: {}]
  %s4 = inlined_call_operand.vmem [shape: f32[1,4], index: 4, kind: input, shape index: {}]
  %s5 = inlined_call_operand.hbm [shape: f32[2,4], index: 5, kind: output, shape index: {}]
  %s6 = sld [smem:[#allocation0]]
  $region30: #{tpu_custom_call.1} parent=0
    _
  %s8 = ssub.s32 1, %s6
  %s9 = scalar_select 0, %s8, %s6
  $region1: #{tpu_custom_call.1} parent=0
    #allocation2 [shape = 'u8[1024]{0}', space=vmem, size = 0x400, scoped, tag = 'output window, operand 0, single buffered']
    #allocation3 [shape = 's32[1]{0}', space=sflag, size = 0x4, scoped, tag = 'scoped memory for tpu_custom_call.1']
    %10 = vsyncpa [#allocation3], 0
    // Predicated region
    $region2: #{tpu_custom_call.1} parent=1 // pred_check
      _
    $region3: #{tpu_custom_call.1} parent=1 // pred_check_branch
      %12 = sbr.rel (0) target = $region5
    $region4: #{tpu_custom_call.1} parent=1 // pred_region
      _
    $region5: #{tpu_custom_call.1} parent=1 // pred_fallthru
      _
    // Predicated region
    $region6: #{tpu_custom_call.1} parent=1 // pred_check
      _
    $region7: #{tpu_custom_call.1} parent=1 // pred_check_branch
      %14 = sbr.rel (0) target = $region9
    $region8: #{tpu_custom_call.1} parent=1 // pred_region
      _
    $region9: #{tpu_custom_call.1} parent=1 // pred_fallthru
      _
    // Predicated region
    $region10: #{tpu_custom_call.1} parent=1 // pred_check
      _
    $region11: #{tpu_custom_call.1} parent=1 // pred_check_branch
      %16 = sbr.rel (0) target = $region13
    $region12: #{tpu_custom_call.1} parent=1 // pred_region
      _
    $region13: #{tpu_custom_call.1} parent=1 // pred_fallthru
      _
    // Predicated region
    $region14: #{tpu_custom_call.1} parent=1 // pred_check
      _
    $region15: #{tpu_custom_call.1} parent=1 // pred_check_branch
      %18 = sbr.rel (0) target = $region17
    $region16: #{tpu_custom_call.1} parent=1 // pred_region
      _
    $region17: #{tpu_custom_call.1} parent=1 // pred_fallthru
      _
    // Predicated region
    $region18: #{tpu_custom_call.1} parent=1 // pred_check
      _
    $region19: #{tpu_custom_call.1} parent=1 // pred_check_branch
      %20 = sbr.rel (0) target = $region21
    $region20: #{tpu_custom_call.1} parent=1 // pred_region
      _
    $region21: #{tpu_custom_call.1} parent=1 // pred_fallthru
      _
    %v21 = vld [vmem:[%s0] sm:$0x3]
    %v22 = vld [vmem:[%s1] sm:$0xff]
    %v23 = vld [vmem:[%s1 + $0x8] sm:$0xff]
    %v24 = vld [vmem:[%s1 + $0x10] sm:$0xff]
    %v25 = vld [vmem:[%s1 + $0x18] sm:$0xff]
    %v26 = vld [vmem:[%s1 + $0x20] sm:$0xff]
    %v27 = vld [vmem:[%s1 + $0x28] sm:$0xff]
    %v28 = vld [vmem:[%s1 + $0x30] sm:$0xff]
    %v29 = vld [vmem:[%s1 + $0x38] sm:$0xff]
    %v30 = vld [vmem:[%s1 + $0x40] sm:$0xff]
    %v31 = vld [vmem:[%s1 + $0x48] sm:$0xff]
    %v32 = vld [vmem:[%s1 + $0x50] sm:$0xff]
    %v33 = vld [vmem:[%s1 + $0x58] sm:$0xff]
    %v34 = vld [vmem:[%s1 + $0x60] sm:$0xff]
    %v35 = vld [vmem:[%s1 + $0x68] sm:$0xff]
    %v36 = vld [vmem:[%s1 + $0x70] sm:$0xff]
    %v37 = vld [vmem:[%s1 + $0x78] sm:$0xff]
    %v38 = vld [vmem:[%s2] sm:$0x1]
    %v40 = vlaneseq
    %v41 = vshrl.u32 %v40, 7
    %v42 = vsub.s32 0, %v41
    %v43 = vrot.slane %v38, %v42
    %45 = vmatprep.subr.mxu0 0.0
    %46 = vmatpush1.msra.mxu0 %v37
    %47 = vmatprep.subr.mxu0 0.0
    %48 = vmatpush1.msra.mxu0 %v36
    %49 = vmatprep.subr.mxu0 0.0
    %50 = vmatpush1.msra.mxu0 %v35
    %51 = vmatprep.subr.mxu0 0.0
    %52 = vmatpush1.msra.mxu0 %v34
    %53 = vmatprep.subr.mxu0 0.0
    %54 = vmatpush1.msra.mxu0 %v33
    %55 = vmatprep.subr.mxu0 0.0
    %56 = vmatpush1.msra.mxu0 %v32
    %57 = vmatprep.subr.mxu0 0.0
    %58 = vmatpush1.msra.mxu0 %v31
    %59 = vmatprep.subr.mxu0 0.0
    %60 = vmatpush1.msra.mxu0 %v30
    %61 = vmatprep.subr.mxu0 0.0
    %62 = vmatpush1.msra.mxu0 %v29
    %63 = vmatprep.subr.mxu0 0.0
    %64 = vmatpush1.msra.mxu0 %v28
    %65 = vmatprep.subr.mxu0 0.0
    %66 = vmatpush1.msra.mxu0 %v27
    %67 = vmatprep.subr.mxu0 0.0
    %68 = vmatpush1.msra.mxu0 %v26
    %69 = vmatprep.subr.mxu0 0.0
    %70 = vmatpush1.msra.mxu0 %v25
    %71 = vmatprep.subr.mxu0 0.0
    %72 = vmatpush1.msra.mxu0 %v24
    %73 = vmatprep.subr.mxu0 0.0
    %74 = vmatpush1.msra.mxu0 %v23
    %75 = vmatprep.subr.mxu0 0.0
    %76 = vmatpush1.msra.mxu0 %v22
    %77 = vmatprep.subr.mxu0 0.0
    %78 = vmatpush2.msra.mxu0 0.0
    %79 = vmatprep.subr.mxu0 0.0
    %80 = vmatpush2.msra.mxu0 0.0
    %81 = vmatprep.subr.mxu0 0.0
    %82 = vmatpush2.msra.mxu0 0.0
    %83 = vmatprep.subr.mxu0 0.0
    %84 = vmatpush2.msra.mxu0 0.0
    %85 = vmatprep.subr.mxu0 0.0
    %86 = vmatpush2.msra.mxu0 0.0
    %87 = vmatprep.subr.mxu0 0.0
    %88 = vmatpush2.msra.mxu0 0.0
    %89 = vmatprep.subr.mxu0 0.0
    %90 = vmatpush2.msra.mxu0 0.0
    %91 = vmatprep.subr.mxu0 0.0
    %92 = vmatpush2.msra.mxu0 0.0
    %93 = vmatprep.subr.mxu0 0.0
    %94 = vmatpush2.msra.mxu0 0.0
    %95 = vmatprep.subr.mxu0 0.0
    %96 = vmatpush2.msra.mxu0 0.0
    %97 = vmatprep.subr.mxu0 0.0
    %98 = vmatpush2.msra.mxu0 0.0
    %99 = vmatprep.subr.mxu0 0.0
    %100 = vmatpush2.msra.mxu0 0.0
    %101 = vmatprep.subr.mxu0 0.0
    %102 = vmatpush2.msra.mxu0 0.0
    %103 = vmatprep.subr.mxu0 0.0
    %104 = vmatpush2.msra.mxu0 0.0
    %105 = vmatprep.subr.mxu0 0.0
    %106 = vmatpush2.msra.mxu0 0.0
    %107 = vmatprep.subr.mxu0 0.0
    %108 = vmatpush2.msra.mxu0 0.0
    %109 = vmatprep.mubr.f32.mxu0 0.0
    %110 = vmatmul.mubr.f32.gmra.mxu0 %v21
    %v111 = vpop.f32.mrf.mxu0
    %v112 = vadd.f32 %v43, %v111
    %v113 = vpop.f32.mrf.mxu0
    %114 = vdwg.mxu0
    %v115 = vmax.f32 %v112, 0.0
    %v116 = vld [vmem:[%s3] sm:$0xff]
    %v117 = vld [vmem:[%s3 + $0x8] sm:$0xff]
    %v118 = vld [vmem:[%s3 + $0x10] sm:$0xff]
    %v119 = vld [vmem:[%s3 + $0x18] sm:$0xff]
    %v120 = vld [vmem:[%s3 + $0x20] sm:$0xff]
    %v121 = vld [vmem:[%s3 + $0x28] sm:$0xff]
    %v122 = vld [vmem:[%s3 + $0x30] sm:$0xff]
    %v123 = vld [vmem:[%s3 + $0x38] sm:$0xff]
    %v124 = vld [vmem:[%s3 + $0x40] sm:$0xff]
    %v125 = vld [vmem:[%s3 + $0x48] sm:$0xff]
    %v126 = vld [vmem:[%s3 + $0x50] sm:$0xff]
    %v127 = vld [vmem:[%s3 + $0x58] sm:$0xff]
    %v128 = vld [vmem:[%s3 + $0x60] sm:$0xff]
    %v129 = vld [vmem:[%s3 + $0x68] sm:$0xff]
    %v130 = vld [vmem:[%s3 + $0x70] sm:$0xff]
    %v131 = vld [vmem:[%s3 + $0x78] sm:$0xff]
    %v132 = vld [vmem:[%s4] sm:$0x1]
    %v134 = vlaneseq
    %v135 = vshrl.u32 %v134, 7
    %v136 = vsub.s32 0, %v135
    %v137 = vrot.slane %v132, %v136
    %139 = vmatprep.subr.mxu0 0.0
    %140 = vmatpush1.msra.mxu0 %v131
    %141 = vmatprep.subr.mxu0 0.0
    %142 = vmatpush1.msra.mxu0 %v130
    %143 = vmatprep.subr.mxu0 0.0
    %144 = vmatpush1.msra.mxu0 %v129
    %145 = vmatprep.subr.mxu0 0.0
    %146 = vmatpush1.msra.mxu0 %v128
    %147 = vmatprep.subr.mxu0 0.0
    %148 = vmatpush1.msra.mxu0 %v127
    %149 = vmatprep.subr.mxu0 0.0
    %150 = vmatpush1.msra.mxu0 %v126
    %151 = vmatprep.subr.mxu0 0.0
    %152 = vmatpush1.msra.mxu0 %v125
    %153 = vmatprep.subr.mxu0 0.0
    %154 = vmatpush1.msra.mxu0 %v124
    %155 = vmatprep.subr.mxu0 0.0
    %156 = vmatpush1.msra.mxu0 %v123
    %157 = vmatprep.subr.mxu0 0.0
    %158 = vmatpush1.msra.mxu0 %v122
    %159 = vmatprep.subr.mxu0 0.0
    %160 = vmatpush1.msra.mxu0 %v121
    %161 = vmatprep.subr.mxu0 0.0
    %162 = vmatpush1.msra.mxu0 %v120
    %163 = vmatprep.subr.mxu0 0.0
    %164 = vmatpush1.msra.mxu0 %v119
    %165 = vmatprep.subr.mxu0 0.0
    %166 = vmatpush1.msra.mxu0 %v118
    %167 = vmatprep.subr.mxu0 0.0
    %168 = vmatpush1.msra.mxu0 %v117
    %169 = vmatprep.subr.mxu0 0.0
    %170 = vmatpush1.msra.mxu0 %v116
    %171 = vmatprep.subr.mxu0 0.0
    %172 = vmatpush2.msra.mxu0 0.0
    %173 = vmatprep.subr.mxu0 0.0
    %174 = vmatpush2.msra.mxu0 0.0
    %175 = vmatprep.subr.mxu0 0.0
    %176 = vmatpush2.msra.mxu0 0.0
    %177 = vmatprep.subr.mxu0 0.0
    %178 = vmatpush2.msra.mxu0 0.0
    %179 = vmatprep.subr.mxu0 0.0
    %180 = vmatpush2.msra.mxu0 0.0
    %181 = vmatprep.subr.mxu0 0.0
    %182 = vmatpush2.msra.mxu0 0.0
    %183 = vmatprep.subr.mxu0 0.0
    %184 = vmatpush2.msra.mxu0 0.0
    %185 = vmatprep.subr.mxu0 0.0
    %186 = vmatpush2.msra.mxu0 0.0
    %187 = vmatprep.subr.mxu0 0.0
    %188 = vmatpush2.msra.mxu0 0.0
    %189 = vmatprep.subr.mxu0 0.0
    %190 = vmatpush2.msra.mxu0 0.0
    %191 = vmatprep.subr.mxu0 0.0
    %192 = vmatpush2.msra.mxu0 0.0
    %193 = vmatprep.subr.mxu0 0.0
    %194 = vmatpush2.msra.mxu0 0.0
    %195 = vmatprep.subr.mxu0 0.0
    %196 = vmatpush2.msra.mxu0 0.0
    %197 = vmatprep.subr.mxu0 0.0
    %198 = vmatpush2.msra.mxu0 0.0
    %199 = vmatprep.subr.mxu0 0.0
    %200 = vmatpush2.msra.mxu0 0.0
    %201 = vmatprep.subr.mxu0 0.0
    %202 = vmatpush2.msra.mxu0 0.0
    %203 = vmatprep.mubr.f32.mxu0 0.0
    %204 = vmatmul.mubr.f32.gmra.mxu0 %v115
    %v205 = vpop.f32.mrf.mxu0
    %v206 = vadd.f32 %v137, %v205
    %v207 = vpop.f32.mrf.mxu0
    %208 = vdwg.mxu0
    %v209 = vxor.u32 %v206, 2147483648
    %v210 = vmul.f32 %v209, 1.442695
    %v211 = vpow.pop %v210
    %v212 = vadd.f32 %v211, 1.0
    %v213 = vrcp.pop %v212
    %v214 = vmul.f32 1.0, %v213
    %vm215 = vcmask 25600
    %216 = vst.msk [vmem:[#allocation2] sm:$0x3] %vm215, %v214
    // Predicated region
    $region22: #{tpu_custom_call.1} parent=1 // pred_check
      _
    $region23: #{tpu_custom_call.1} parent=1 // pred_check_branch
      %218 = sbr.rel (0) target = $region25
    $region24: #{tpu_custom_call.1} parent=1 // pred_region
      %s220 = ssub.s32 32, 32
      %221 = vsyncadd [#allocation3], %s220
      %s223 = sshll.u32 [#allocation2], 4
      %s224 = int_to_ptr.vmem [resolvable:$true] %s223
      %226 = dma.vmem_to_hbm [thread:$0]  %s224, 32, %s5, [#allocation3]
    $region25: #{tpu_custom_call.1} parent=1 // pred_fallthru
      _
    // Predicated region
    $region26: #{tpu_custom_call.1} parent=1 // pred_check
      _
    $region27: #{tpu_custom_call.1} parent=1 // pred_check_branch
      %228 = sbr.rel (0) target = $region29
    $region28: #{tpu_custom_call.1} parent=1 // pred_region
      %229 = dma.done [#allocation3], 32
    $region29: #{tpu_custom_call.1} parent=1 // pred_fallthru
      _
    %230 = vsyncpa [#allocation3], 1

</llo_original>
